<compile_context>
chip_gen: v6e
topology: v6e:2x2x1
jax: 0.10.0
libtpu: 0.0.40
codegen_flags: <defaults>
</compile_context>

<pallas_src>
import functools

import jax
import jax.numpy as jnp
import numpy as np
from jax.experimental import pallas as pl
from jax.experimental.pallas import tpu as pltpu


def _round_up(x, m):
    return ((x + m - 1) // m) * m


# ---------------------------------------------------------------------------
# Kernels
# ---------------------------------------------------------------------------

def _rff_kernel_rows(x_ref, f_ref, out_ref, *, h):
    """Row-major layout:  x_ref (TN, 3), f_ref (3, H), out_ref (TN, 2H)."""
    x = x_ref[...]                                        # (TN, 3)
    pd = x[:, 0:1] * f_ref[0:1, :]                        # (TN, H) f32
    gate = jnp.cos(x[:, 1:2] * f_ref[1:2, :]) * jnp.cos(x[:, 2:3] * f_ref[2:3, :])
    out_ref[:, :h] = (jnp.sin(pd) * gate).astype(out_ref.dtype)
    out_ref[:, h:] = (jnp.cos(pd) * gate).astype(out_ref.dtype)


def _rff_kernel_cols(xT_ref, fT_ref, out_ref, *, h):
    """Transposed, lane-dense layout: xT_ref (3, TN), fT_ref (H, 3), out_ref (2H, TN)."""
    xT = xT_ref[...]                                      # (3, TN)
    fT = fT_ref[...]                                      # (H, 3)
    pd = fT[:, 0:1] * xT[0:1, :]                          # (H, TN) f32
    gate = jnp.cos(fT[:, 1:2] * xT[1:2, :]) * jnp.cos(fT[:, 2:3] * xT[2:3, :])
    out_ref[:h, :] = (jnp.sin(pd) * gate).astype(out_ref.dtype)
    out_ref[h:, :] = (jnp.cos(pd) * gate).astype(out_ref.dtype)


# ---------------------------------------------------------------------------
# Wrapper
# ---------------------------------------------------------------------------

def _pick_row_tile(n, two_h, requested, lane_multiple, vmem_budget_bytes):
    """Largest row tile that fits the VMEM budget (double-buffered in/out tiles),
    clamped so the parallel grid keeps >= 2 steps when there is enough work."""
    if lane_multiple == 128:
        # transposed: out (2H_pad8, rt) + x (3->8, rt), both double-buffered, f32
        per_row = 2 * 4 * (_round_up(two_h, 8) + 8)
    else:
        # row-major: out (rt, 2H_pad128) + x (rt, 3->128), both double-buffered, f32
        per_row = 2 * 4 * (_round_up(two_h, 128) + 128)
    max_rt = max(lane_multiple, vmem_budget_bytes // per_row)
    rt = min(int(requested), int(max_rt))
    # Keep at least 2 grid steps (v7x megacore shards the "parallel" axis).
    half = _round_up(max((n + 1) // 2, 1), lane_multiple)
    rt = min(rt, max(half, lane_multiple))
    rt = max(lane_multiple, (rt // lane_multiple) * lane_multiple)
    return int(rt)


def rff_r3s2_pallas(x, freqs_pos_dist, freqs_pos_angle, freqs_ori_angle,
                    out_features, *, row_tile=512, out_dtype=jnp.float32,
                    vmem_budget_bytes=20 << 20):
    """x: [..., 3] float.  freqs_*: (H, 1).  Returns [..., out_features] in out_dtype."""
    assert x.shape[-1] == 3
    lead_shape = x.shape[:-1]
    h = int(freqs_pos_dist.shape[0])
    two_h = 2 * h

    x_flat = x.reshape(-1, 3).astype(jnp.float32)
    n = x_flat.shape[0]

    # Single packed frequency table: row 0 = dist, 1 = pos_angle, 2 = ori_angle.
    freqs = jnp.stack(
        [freqs_pos_dist.reshape(-1),
         freqs_pos_angle.reshape(-1),
         freqs_ori_angle.reshape(-1)], axis=0).astype(jnp.float32)       # (3, H)

    # If 2H < 128 a row-major output store would be a masked partial store
    # (vst.msk); compute transposed so the written last dim is lane-dense.
    transposed = two_h < 128
    lane_multiple = 128 if transposed else 8

    rt = _pick_row_tile(n, two_h, row_tile, lane_multiple, vmem_budget_bytes)
    n_pad = _round_up(max(n, 1), rt)
    if n_pad != n:
        x_flat = jnp.pad(x_flat, ((0, n_pad - n), (0, 0)))
    grid = (n_pad // rt,)
    params = pltpu.CompilerParams(dimension_semantics=("parallel",))

    if transposed:
        xT = x_flat.T                      # (3, n_pad)
        fT = freqs.T                       # (H, 3)
        outT = pl.pallas_call(
            functools.partial(_rff_kernel_cols, h=h),
            out_shape=jax.ShapeDtypeStruct((two_h, n_pad), out_dtype),
            grid_spec=pltpu.PrefetchScalarGridSpec(
                num_scalar_prefetch=0,
                grid=grid,
                in_specs=[pl.BlockSpec((3, rt), lambda i: (0, i)),
                          pl.BlockSpec((h, 3), lambda i: (0, 0))],
                out_specs=pl.BlockSpec((two_h, rt), lambda i: (0, i))),
            compiler_params=params,
        )(xT, fT)
        out_flat = outT[:out_features, :n].T          # drop compensation + row pad
    else:
        out = pl.pallas_call(
            functools.partial(_rff_kernel_rows, h=h),
            out_shape=jax.ShapeDtypeStruct((n_pad, two_h), out_dtype),
            grid_spec=pltpu.PrefetchScalarGridSpec(
                num_scalar_prefetch=0,
                grid=grid,
                in_specs=[pl.BlockSpec((rt, 3), lambda i: (i, 0)),
                          pl.BlockSpec((3, h), lambda i: (0, 0))],
                out_specs=pl.BlockSpec((rt, two_h), lambda i: (i, 0))),
            compiler_params=params,
        )(x_flat, freqs)
        out_flat = out[:n, :out_features]             # drop row pad + compensation

    return out_flat.reshape(*lead_shape, out_features)


# ---------------------------------------------------------------------------
# Parameter construction + pure-JAX reference (matches the PyTorch module)
# ---------------------------------------------------------------------------

def make_params(key, out_features, sigma, lmax):
    compensation = 1 if (out_features % 2 != 0) else 0
    h = out_features // 2 + compensation
    k1, k2, k3 = jax.random.split(key, 3)
    freqs_pos_dist = jax.random.normal(k1, (h, 1), jnp.float32) * sigma / np.sqrt(2.0)
    freqs_pos_angle = jax.random.randint(k2, (h, 1), 0, lmax).astype(jnp.float32)
    freqs_ori_angle = jax.random.randint(k3, (h, 1), 0, lmax).astype(jnp.float32)
    return freqs_pos_dist, freqs_pos_angle, freqs_ori_angle, compensation


def reference_jax(x, fd, fa, fo, out_features):
    pd = x[..., 0, None] * fd.reshape(-1)      # [..., H]
    pa = x[..., 1, None] * fa.reshape(-1)
    po = x[..., 2, None] * fo.reshape(-1)
    xd = jnp.concatenate([jnp.sin(pd), jnp.cos(pd)], axis=-1)
    xa = jnp.concatenate([jnp.cos(pa), jnp.cos(pa)], axis=-1)
    xo = jnp.concatenate([jnp.cos(po), jnp.cos(po)], axis=-1)
    out = xd * xa * xo
    return out[..., :out_features]


if __name__ == "__main__":
    sigma, lmax = 1.0, 4
    key = jax.random.PRNGKey(0)
    kp1, kp2, kx = jax.random.split(key, 3)

    # Small input: batch=2, seq=8, 3 invariants per point.
    x = jax.random.normal(kx, (2, 8, 3), jnp.float32)

    # out_features=32 exercises the transposed lane-dense path (2H < 128);
    # out_features=256 exercises the row-major slab-store path.
    for kp, out_features in ((kp1, 32), (kp2, 256)):
        fd, fa, fo, _ = make_params(kp, out_features, sigma, lmax)
        run = jax.jit(functools.partial(rff_r3s2_pallas, out_features=out_features))
        out = jax.block_until_ready(run(x, fd, fa, fo))
        ref = reference_jax(x, fd, fa, fo, out_features)
        np.testing.assert_allclose(np.asarray(out), np.asarray(ref),
                                   rtol=1e-5, atol=1e-5)

    print("KERNEL_OK")
</pallas_src>

<mosaic_0001>
module attributes {stable_mosaic.version = 11 : i64} {
  func.func @_rff_kernel_cols(%arg0: i32, %arg1: memref<3x128xf32, #tpu.memory_space<vmem>>, %arg2: memref<16x3xf32, #tpu.memory_space<vmem>>, %arg3: memref<32x128xf32, #tpu.memory_space<vmem>>) attributes {dimension_semantics = [#tpu.dimension_semantics<parallel>], iteration_bounds = array<i64: 1>, scalar_prefetch = 0 : i64, scratch_operands = 0 : i64, tpu.core_type = #tpu.core_type<tc>, window_params = [{transform_indices = @transform_0, window_bounds = array<i64: 3, 128>}, {pipeline_mode = #tpu.pipeline_mode<synchronous>, transform_indices = @transform_1, window_bounds = array<i64: 16, 3>}, {transform_indices = @transform_2, window_bounds = array<i64: 32, 128>}]} {
    %c0 = arith.constant 0 : index
    %c0_0 = arith.constant 0 : index
    %0 = vector.load %arg1[%c0, %c0_0] : memref<3x128xf32, #tpu.memory_space<vmem>>, vector<3x128xf32>
    %c0_1 = arith.constant 0 : index
    %c0_2 = arith.constant 0 : index
    %1 = vector.load %arg2[%c0_1, %c0_2] : memref<16x3xf32, #tpu.memory_space<vmem>>, vector<16x3xf32>
    %2 = vector.extract_strided_slice %1 {offsets = [0, 0], sizes = [16, 1], strides = [1, 1]} : vector<16x3xf32> to vector<16x1xf32>
    %3 = vector.extract_strided_slice %0 {offsets = [0, 0], sizes = [1, 128], strides = [1, 1]} : vector<3x128xf32> to vector<1x128xf32>
    %4 = vector.broadcast %2 : vector<16x1xf32> to vector<16x128xf32>
    %5 = vector.broadcast %3 : vector<1x128xf32> to vector<16x128xf32>
    %6 = arith.mulf %4, %5 : vector<16x128xf32>
    %7 = vector.extract_strided_slice %1 {offsets = [0, 1], sizes = [16, 1], strides = [1, 1]} : vector<16x3xf32> to vector<16x1xf32>
    %8 = vector.extract_strided_slice %0 {offsets = [1, 0], sizes = [1, 128], strides = [1, 1]} : vector<3x128xf32> to vector<1x128xf32>
    %9 = vector.broadcast %7 : vector<16x1xf32> to vector<16x128xf32>
    %10 = vector.broadcast %8 : vector<1x128xf32> to vector<16x128xf32>
    %11 = arith.mulf %9, %10 : vector<16x128xf32>
    %12 = math.cos %11 : vector<16x128xf32>
    %13 = vector.extract_strided_slice %1 {offsets = [0, 2], sizes = [16, 1], strides = [1, 1]} : vector<16x3xf32> to vector<16x1xf32>
    %14 = vector.extract_strided_slice %0 {offsets = [2, 0], sizes = [1, 128], strides = [1, 1]} : vector<3x128xf32> to vector<1x128xf32>
    %15 = vector.broadcast %13 : vector<16x1xf32> to vector<16x128xf32>
    %16 = vector.broadcast %14 : vector<1x128xf32> to vector<16x128xf32>
    %17 = arith.mulf %15, %16 : vector<16x128xf32>
    %18 = math.cos %17 : vector<16x128xf32>
    %19 = arith.mulf %12, %18 : vector<16x128xf32>
    %20 = math.sin %6 : vector<16x128xf32>
    %21 = arith.mulf %20, %19 : vector<16x128xf32>
    %c0_3 = arith.constant 0 : index
    %c0_4 = arith.constant 0 : index
    %22 = vector.load %arg3[%c0_3, %c0_4] : memref<32x128xf32, #tpu.memory_space<vmem>>, vector<16x128xf32>
    tpu.vector_store %arg3[%c0_3, %c0_4], %21 {strides = array<i32>} : memref<32x128xf32, #tpu.memory_space<vmem>>, vector<16x128xf32>,
    %23 = math.cos %6 : vector<16x128xf32>
    %24 = arith.mulf %23, %19 : vector<16x128xf32>
    %c16 = arith.constant 16 : index
    %c0_5 = arith.constant 0 : index
    %25 = vector.load %arg3[%c16, %c0_5] : memref<32x128xf32, #tpu.memory_space<vmem>>, vector<16x128xf32>
    tpu.vector_store %arg3[%c16, %c0_5], %24 {strides = array<i32>} : memref<32x128xf32, #tpu.memory_space<vmem>>, vector<16x128xf32>,
    return
  }
  func.func @transform_0(%arg0: i32) -> (i32, i32) {
    %c0_i32 = arith.constant 0 : i32
    %c0_i32_0 = arith.constant 0 : i32
    return %c0_i32, %arg0 : i32, i32
  }
  func.func @transform_1(%arg0: i32) -> (i32, i32) {
    %c0_i32 = arith.constant 0 : i32
    %c0_i32_0 = arith.constant 0 : i32
    %c0_i32_1 = arith.constant 0 : i32
    return %c0_i32, %c0_i32_0 : i32, i32
  }
  func.func @transform_2(%arg0: i32) -> (i32, i32) {
    %c0_i32 = arith.constant 0 : i32
    %c0_i32_0 = arith.constant 0 : i32
    return %c0_i32, %arg0 : i32, i32
  }
}

</mosaic_0001>

<llo_original>
// kernel: rff_r3s2_pallas.1
$region0: #{rff_r3s2_pallas.1}
  #allocation0 [shape = 'u32[]', space=smem, size = 0x4, offset = 0x4, fixed_abs, tag = 'smem constant byte address 0x4 - core index']
  #allocation1 [shape = 'u32[144,128]{1,0:T(1,128)}', space=vmem, size = 0x12000, scoped, tag = 'internal scratch']
  %s0 = inlined_call_operand.vmem [shape: f32[3,128], index: 0, kind: input, shape index: {}]
  %s1 = inlined_call_operand.vmem [shape: f32[16,3], index: 1, kind: input, shape index: {}]
  %s2 = inlined_call_operand.vmem [shape: f32[32,128], index: 2, kind: output, shape index: {}]
  %s3 = sld [smem:[#allocation0]]
  $region18: #{rff_r3s2_pallas.1} parent=0
    _
  %s5 = ssub.s32 1, %s3
  %s6 = scalar_select 0, %s5, %s3
  // Predicated region
  $region2: #{rff_r3s2_pallas.1} parent=0 // pred_check
    _
  $region3: #{rff_r3s2_pallas.1} parent=0 // pred_check_branch
    %8 = sbr.rel (0) target = $region5
  $region4: #{rff_r3s2_pallas.1} parent=0 // pred_region
    _
  $region5: #{rff_r3s2_pallas.1} parent=0 // pred_fallthru
    _
  // Predicated region
  $region6: #{rff_r3s2_pallas.1} parent=0 // pred_check
    _
  $region7: #{rff_r3s2_pallas.1} parent=0 // pred_check_branch
    %10 = sbr.rel (0) target = $region9
  $region8: #{rff_r3s2_pallas.1} parent=0 // pred_region
    _
  $region9: #{rff_r3s2_pallas.1} parent=0 // pred_fallthru
    _
  %v11 = vld [vmem:[%s0] sm:$0x7]
  %v12 = vld [vmem:[%s1] sm:$0xff]
  %v13 = vld [vmem:[%s1 + $0x8] sm:$0xff]
  %15 = vset.pattern.permute.xlu0 0
  %16 = vperm.xlu0 %15, %v12
  %v17 = vpop.permute.xlu0 %16
  %20 = vset.pattern.permute.xlu0 0
  %21 = vperm.xlu0 %20, %v13
  %v22 = vpop.permute.xlu0 %21
  %v24 = vlaneseq
  %v25 = vshrl.u32 %v24, 7
  %v26 = vsub.s32 0, %v25
  %v27 = vrot.slane %v11, %v26
  %v28 = vmul.f32 %v17, %v27
  %v29 = vmul.f32 %v22, %v27
  %30 = vset.pattern.permute.xlu0 1
  %31 = vperm.xlu0 %30, %v12
  %v32 = vpop.permute.xlu0 %31
  %34 = vset.pattern.permute.xlu0 1
  %35 = vperm.xlu0 %34, %v13
  %v36 = vpop.permute.xlu0 %35
  %v38 = vlaneseq
  %v39 = vshrl.u32 %v38, 7
  %v40 = vsub.s32 1, %v39
  %v41 = vrot.slane %v11, %v40
  %v42 = vmul.f32 %v32, %v41
  %v43 = vmul.f32 %v36, %v41
  %v44 = vand.u32 2147483647, %v42
  %vm45 = vcmp.le.f32.partialorder %v44, 0.7853982
  %vm46 = vcmp.lt.s32.totalorder %v42, 0
  %v47 = vand.u32 %v42, 2139095040
  %v48 = vshrl.u32 %v47, 23
  %v49 = vsub.s32 %v48, 127
  %v50 = vand.u32 2147483647, %v42
  %v51 = vand.u32 %v50, 8388607
  %v52 = vor.u32 %v51, 8388608
  %v53 = vsub.s32 0, %v52
  %v54 = vadd.s32 %v49, 1
  %vm55 = vcmp.gt.s32.totalorder %v54, 0
  %v56 = vsel %vm55, %v54, 0
  %v57 = vshrl.u32 %v56, 5
  %v58 = vand.u32 %v56, 31
  %v59 = vsub.s32 32, %v58
  %v60 = vshrl.u32 683565275, %v59
  %v61 = vshll.u32 683565275, %v58
  %v62 = vshrl.u32 2475754826, %v59
  %v63 = vor.u32 %v61, %v62
  %v64 = vshll.u32 2475754826, %v58
  %v65 = vshrl.u32 2131351028, %v59
  %v66 = vor.u32 %v64, %v65
  %v67 = vshll.u32 2131351028, %v58
  %v68 = vshrl.u32 2102212464, %v59
  %v69 = vor.u32 %v67, %v68
  %v70 = vshll.u32 2102212464, %v58
  %v71 = vshrl.u32 920167782, %v59
  %v72 = vor.u32 %v70, %v71
  %v73 = vshll.u32 920167782, %v58
  %v74 = vshrl.u32 1326507024, %v59
  %v75 = vor.u32 %v73, %v74
  %vm76 = vcmp.lt.s32.totalorder %v57, 1
  %vm77 = vcmp.lt.s32.totalorder %v57, 2
  %vm78 = vcmp.lt.s32.totalorder %v57, 3
  %vm79 = vcmp.lt.s32.totalorder %v57, 4
  %v80 = vsel %vm76, %v60, %v63
  %v81 = vsel %vm79, %v69, 2102212464
  %v82 = vsel %vm78, %v66, %v81
  %v83 = vsel %vm77, %v80, %v82
  %v84 = vsel %vm76, %v63, %v66
  %v85 = vsel %vm79, %v72, 920167782
  %v86 = vsel %vm78, %v69, %v85
  %v87 = vsel %vm77, %v84, %v86
  %v88 = vsel %vm76, %v66, %v69
  %v89 = vsel %vm79, %v75, 1326507024
  %v90 = vsel %vm78, %v72, %v89
  %v91 = vsel %vm77, %v88, %v90
  %v92 = vshll.u32 %v52, 8
  %v93 = vmul.u32.u64.compose %v92, %v91
  %v94 = vextract.low.u32 %v93
  %v95 = vextract.high.u32 %v93
  %v96 = vmul.u32.u64.compose %v92, %v87
  %v97 = vextract.low.u32 %v96
  %v98 = vextract.high.u32 %v96
  %v99 = vmul.u32 %v92, %v83
  %v100 = vadd.s32 %v95, %v97
  %vm101 = vc.u32 %v95, %v97
  %v102 = vadd.s32 %v98, 1
  %v103 = vsel %vm101, %v102, %v98
  %v104 = vadd.s32 %v99, %v103
  %v105 = vadd.s32 %v104, 536870912
  %v106 = vshrl.u32 %v105, 30
  %v107 = vshll.u32 %v106, 30
  %v108 = vsub.s32 %v104, %v107
  %vm109 = vcmp.lt.s32.totalorder %v108, 0
  %v110 = vsub.s32 0, %v108
  %v111 = vsel %vm109, %v110, %v108
  %v112 = vclz %v111
  %v113 = vsub.s32 %v112, 2
  %vm114 = vcmp.gt.s32.totalorder 0, %v113
  %v115 = vsel %vm114, 0, %v113
  %v116 = vsub.s32 32, %v115
  %v117 = vshll.u32 %v108, %v115
  %v118 = vshrl.u32 %v100, %v116
  %v119 = vor.u32 %v117, %v118
  %v120 = vsub.s32 4294967266, %v115
  %v121 = vadd.s32 %v120, 127
  %v122 = vshll.u32 %v121, 23
  %v123 = vor.u32 4788187, %v122
  %v124 = vand.u32 2147483647, %v123
  %v126 = vcvt.s32.f32 %v119
  %v127 = vmul.f32 %v126, %v124
  %v128 = vxor.u32 %v127, 2147483648
  %v129 = vsel %vm46, %v128, %v127
  %v130 = vsub.s32 4, %v106
  %v131 = vsel %vm46, %v130, %v106
  %v132 = vsel %vm45, %v42, %v129
  %v133 = vsel %vm45, 0, %v131
  %v134 = vcosq.f32.pop %v132
  %v135 = vsinq.f32.pop %v132
  %vm136 = vweird.f32 %v42
  %v137 = vand.u32 %v133, 3
  %vm138 = vcmp.lt.s32.totalorder %v137, 2
  %vm139 = vcmp.eq.s32.totalorder %v137, 0
  %v140 = vxor.u32 %v135, 2147483648
  %v141 = vsel %vm139, %v134, %v140
  %vm142 = vcmp.eq.s32.totalorder %v137, 2
  %v143 = vxor.u32 %v134, 2147483648
  %v144 = vsel %vm142, %v143, %v135
  %v145 = vsel %vm138, %v141, %v144
  %v146 = vsel %vm136, nan, %v145
  %v147 = vand.u32 2147483647, %v43
  %vm148 = vcmp.le.f32.partialorder %v147, 0.7853982
  %vm149 = vcmp.lt.s32.totalorder %v43, 0
  %v150 = vand.u32 %v43, 2139095040
  %v151 = vshrl.u32 %v150, 23
  %v152 = vsub.s32 %v151, 127
  %v153 = vand.u32 2147483647, %v43
  %v154 = vand.u32 %v153, 8388607
  %v155 = vor.u32 %v154, 8388608
  %v156 = vsub.s32 0, %v155
  %v157 = vadd.s32 %v152, 1
  %vm158 = vcmp.gt.s32.totalorder %v157, 0
  %v159 = vsel %vm158, %v157, 0
  %v160 = vshrl.u32 %v159, 5
  %v161 = vand.u32 %v159, 31
  %v162 = vsub.s32 32, %v161
  %v163 = vshrl.u32 683565275, %v162
  %v164 = vshll.u32 683565275, %v161
  %v165 = vshrl.u32 2475754826, %v162
  %v166 = vor.u32 %v164, %v165
  %v167 = vshll.u32 2475754826, %v161
  %v168 = vshrl.u32 2131351028, %v162
  %v169 = vor.u32 %v167, %v168
  %v170 = vshll.u32 2131351028, %v161
  %v171 = vshrl.u32 2102212464, %v162
  %v172 = vor.u32 %v170, %v171
  %v173 = vshll.u32 2102212464, %v161
  %v174 = vshrl.u32 920167782, %v162
  %v175 = vor.u32 %v173, %v174
  %v176 = vshll.u32 920167782, %v161
  %v177 = vshrl.u32 1326507024, %v162
  %v178 = vor.u32 %v176, %v177
  %vm179 = vcmp.lt.s32.totalorder %v160, 1
  %vm180 = vcmp.lt.s32.totalorder %v160, 2
  %vm181 = vcmp.lt.s32.totalorder %v160, 3
  %vm182 = vcmp.lt.s32.totalorder %v160, 4
  %v183 = vsel %vm179, %v163, %v166
  %v184 = vsel %vm182, %v172, 2102212464
  %v185 = vsel %vm181, %v169, %v184
  %v186 = vsel %vm180, %v183, %v185
  %v187 = vsel %vm179, %v166, %v169
  %v188 = vsel %vm182, %v175, 920167782
  %v189 = vsel %vm181, %v172, %v188
  %v190 = vsel %vm180, %v187, %v189
  %v191 = vsel %vm179, %v169, %v172
  %v192 = vsel %vm182, %v178, 1326507024
  %v193 = vsel %vm181, %v175, %v192
  %v194 = vsel %vm180, %v191, %v193
  %v195 = vshll.u32 %v155, 8
  %v196 = vmul.u32.u64.compose %v195, %v194
  %v197 = vextract.low.u32 %v196
  %v198 = vextract.high.u32 %v196
  %v199 = vmul.u32.u64.compose %v195, %v190
  %v200 = vextract.low.u32 %v199
  %v201 = vextract.high.u32 %v199
  %v202 = vmul.u32 %v195, %v186
  %v203 = vadd.s32 %v198, %v200
  %vm204 = vc.u32 %v198, %v200
  %v205 = vadd.s32 %v201, 1
  %v206 = vsel %vm204, %v205, %v201
  %v207 = vadd.s32 %v202, %v206
  %v208 = vadd.s32 %v207, 536870912
  %v209 = vshrl.u32 %v208, 30
  %v210 = vshll.u32 %v209, 30
  %v211 = vsub.s32 %v207, %v210
  %vm212 = vcmp.lt.s32.totalorder %v211, 0
  %v213 = vsub.s32 0, %v211
  %v214 = vsel %vm212, %v213, %v211
  %v215 = vclz %v214
  %v216 = vsub.s32 %v215, 2
  %vm217 = vcmp.gt.s32.totalorder 0, %v216
  %v218 = vsel %vm217, 0, %v216
  %v219 = vsub.s32 32, %v218
  %v220 = vshll.u32 %v211, %v218
  %v221 = vshrl.u32 %v203, %v219
  %v222 = vor.u32 %v220, %v221
  %v223 = vsub.s32 4294967266, %v218
  %v224 = vadd.s32 %v223, 127
  %v225 = vshll.u32 %v224, 23
  %v226 = vor.u32 4788187, %v225
  %v227 = vand.u32 2147483647, %v226
  %v229 = vcvt.s32.f32 %v222
  %v230 = vmul.f32 %v229, %v227
  %v231 = vxor.u32 %v230, 2147483648
  %v232 = vsel %vm149, %v231, %v230
  %v233 = vsub.s32 4, %v209
  %v234 = vsel %vm149, %v233, %v209
  %v235 = vsel %vm148, %v43, %v232
  %v236 = vsel %vm148, 0, %v234
  %v237 = vcosq.f32.pop %v235
  %v238 = vsinq.f32.pop %v235
  %vm239 = vweird.f32 %v43
  %v240 = vand.u32 %v236, 3
  %vm241 = vcmp.lt.s32.totalorder %v240, 2
  %vm242 = vcmp.eq.s32.totalorder %v240, 0
  %v243 = vxor.u32 %v238, 2147483648
  %v244 = vsel %vm242, %v237, %v243
  %vm245 = vcmp.eq.s32.totalorder %v240, 2
  %v246 = vxor.u32 %v237, 2147483648
  %v247 = vsel %vm245, %v246, %v238
  %v248 = vsel %vm241, %v244, %v247
  %v249 = vsel %vm239, nan, %v248
  %250 = vset.pattern.permute.xlu0 2
  %251 = vperm.xlu0 %250, %v12
  %v252 = vpop.permute.xlu0 %251
  %254 = vset.pattern.permute.xlu0 2
  %255 = vperm.xlu0 %254, %v13
  %v256 = vpop.permute.xlu0 %255
  %v258 = vlaneseq
  %v259 = vshrl.u32 %v258, 7
  %v260 = vsub.s32 2, %v259
  %v261 = vrot.slane %v11, %v260
  %v262 = vmul.f32 %v252, %v261
  %v263 = vmul.f32 %v256, %v261
  %v264 = vand.u32 2147483647, %v262
  %vm265 = vcmp.le.f32.partialorder %v264, 0.7853982
  %vm266 = vcmp.lt.s32.totalorder %v262, 0
  %v267 = vand.u32 %v262, 2139095040
  %v268 = vshrl.u32 %v267, 23
  %v269 = vsub.s32 %v268, 127
  %v270 = vand.u32 2147483647, %v262
  %v271 = vand.u32 %v270, 8388607
  %v272 = vor.u32 %v271, 8388608
  %v273 = vsub.s32 0, %v272
  %v274 = vadd.s32 %v269, 1
  %vm275 = vcmp.gt.s32.totalorder %v274, 0
  %v276 = vsel %vm275, %v274, 0
  %v277 = vshrl.u32 %v276, 5
  %v278 = vand.u32 %v276, 31
  %v279 = vsub.s32 32, %v278
  %v280 = vshrl.u32 683565275, %v279
  %v281 = vshll.u32 683565275, %v278
  %v282 = vshrl.u32 2475754826, %v279
  %v283 = vor.u32 %v281, %v282
  %v284 = vshll.u32 2475754826, %v278
  %v285 = vshrl.u32 2131351028, %v279
  %v286 = vor.u32 %v284, %v285
  %v287 = vshll.u32 2131351028, %v278
  %v288 = vshrl.u32 2102212464, %v279
  %v289 = vor.u32 %v287, %v288
  %v290 = vshll.u32 2102212464, %v278
  %v291 = vshrl.u32 920167782, %v279
  %v292 = vor.u32 %v290, %v291
  %v293 = vshll.u32 920167782, %v278
  %v294 = vshrl.u32 1326507024, %v279
  %v295 = vor.u32 %v293, %v294
  %vm296 = vcmp.lt.s32.totalorder %v277, 1
  %vm297 = vcmp.lt.s32.totalorder %v277, 2
  %vm298 = vcmp.lt.s32.totalorder %v277, 3
  %vm299 = vcmp.lt.s32.totalorder %v277, 4
  %v300 = vsel %vm296, %v280, %v283
  %v301 = vsel %vm299, %v289, 2102212464
  %v302 = vsel %vm298, %v286, %v301
  %v303 = vsel %vm297, %v300, %v302
  %v304 = vsel %vm296, %v283, %v286
  %v305 = vsel %vm299, %v292, 920167782
  %v306 = vsel %vm298, %v289, %v305
  %v307 = vsel %vm297, %v304, %v306
  %v308 = vsel %vm296, %v286, %v289
  %v309 = vsel %vm299, %v295, 1326507024
  %v310 = vsel %vm298, %v292, %v309
  %v311 = vsel %vm297, %v308, %v310
  %v312 = vshll.u32 %v272, 8
  %v313 = vmul.u32.u64.compose %v312, %v311
  %v314 = vextract.low.u32 %v313
  %v315 = vextract.high.u32 %v313
  %v316 = vmul.u32.u64.compose %v312, %v307
  %v317 = vextract.low.u32 %v316
  %v318 = vextract.high.u32 %v316
  %v319 = vmul.u32 %v312, %v303
  %v320 = vadd.s32 %v315, %v317
  %vm321 = vc.u32 %v315, %v317
  %v322 = vadd.s32 %v318, 1
  %v323 = vsel %vm321, %v322, %v318
  %v324 = vadd.s32 %v319, %v323
  %v325 = vadd.s32 %v324, 536870912
  %v326 = vshrl.u32 %v325, 30
  %v327 = vshll.u32 %v326, 30
  %v328 = vsub.s32 %v324, %v327
  %vm329 = vcmp.lt.s32.totalorder %v328, 0
  %v330 = vsub.s32 0, %v328
  %v331 = vsel %vm329, %v330, %v328
  %v332 = vclz %v331
  %v333 = vsub.s32 %v332, 2
  %vm334 = vcmp.gt.s32.totalorder 0, %v333
  %v335 = vsel %vm334, 0, %v333
  %v336 = vsub.s32 32, %v335
  %v337 = vshll.u32 %v328, %v335
  %v338 = vshrl.u32 %v320, %v336
  %v339 = vor.u32 %v337, %v338
  %v340 = vsub.s32 4294967266, %v335
  %v341 = vadd.s32 %v340, 127
  %v342 = vshll.u32 %v341, 23
  %v343 = vor.u32 4788187, %v342
  %v344 = vand.u32 2147483647, %v343
  %v346 = vcvt.s32.f32 %v339
  %v347 = vmul.f32 %v346, %v344
  %v348 = vxor.u32 %v347, 2147483648
  %v349 = vsel %vm266, %v348, %v347
  %v350 = vsub.s32 4, %v326
  %v351 = vsel %vm266, %v350, %v326
  %v352 = vsel %vm265, %v262, %v349
  %v353 = vsel %vm265, 0, %v351
  %v354 = vcosq.f32.pop %v352
  %v355 = vsinq.f32.pop %v352
  %vm356 = vweird.f32 %v262
  %v357 = vand.u32 %v353, 3
  %vm358 = vcmp.lt.s32.totalorder %v357, 2
  %vm359 = vcmp.eq.s32.totalorder %v357, 0
  %v360 = vxor.u32 %v355, 2147483648
  %v361 = vsel %vm359, %v354, %v360
  %vm362 = vcmp.eq.s32.totalorder %v357, 2
  %v363 = vxor.u32 %v354, 2147483648
  %v364 = vsel %vm362, %v363, %v355
  %v365 = vsel %vm358, %v361, %v364
  %v366 = vsel %vm356, nan, %v365
  %v367 = vand.u32 2147483647, %v263
  %vm368 = vcmp.le.f32.partialorder %v367, 0.7853982
  %vm369 = vcmp.lt.s32.totalorder %v263, 0
  %v370 = vand.u32 %v263, 2139095040
  %v371 = vshrl.u32 %v370, 23
  %v372 = vsub.s32 %v371, 127
  %v373 = vand.u32 2147483647, %v263
  %v374 = vand.u32 %v373, 8388607
  %v375 = vor.u32 %v374, 8388608
  %v376 = vsub.s32 0, %v375
  %v377 = vadd.s32 %v372, 1
  %vm378 = vcmp.gt.s32.totalorder %v377, 0
  %v379 = vsel %vm378, %v377, 0
  %v380 = vshrl.u32 %v379, 5
  %v381 = vand.u32 %v379, 31
  %v382 = vsub.s32 32, %v381
  %v383 = vshrl.u32 683565275, %v382
  %v384 = vshll.u32 683565275, %v381
  %v385 = vshrl.u32 2475754826, %v382
  %v386 = vor.u32 %v384, %v385
  %v387 = vshll.u32 2475754826, %v381
  %v388 = vshrl.u32 2131351028, %v382
  %v389 = vor.u32 %v387, %v388
  %v390 = vshll.u32 2131351028, %v381
  %v391 = vshrl.u32 2102212464, %v382
  %v392 = vor.u32 %v390, %v391
  %v393 = vshll.u32 2102212464, %v381
  %v394 = vshrl.u32 920167782, %v382
  %v395 = vor.u32 %v393, %v394
  %v396 = vshll.u32 920167782, %v381
  %v397 = vshrl.u32 1326507024, %v382
  %v398 = vor.u32 %v396, %v397
  %vm399 = vcmp.lt.s32.totalorder %v380, 1
  %vm400 = vcmp.lt.s32.totalorder %v380, 2
  %vm401 = vcmp.lt.s32.totalorder %v380, 3
  %vm402 = vcmp.lt.s32.totalorder %v380, 4
  %v403 = vsel %vm399, %v383, %v386
  %v404 = vsel %vm402, %v392, 2102212464
  %v405 = vsel %vm401, %v389, %v404
  %v406 = vsel %vm400, %v403, %v405
  %v407 = vsel %vm399, %v386, %v389
  %v408 = vsel %vm402, %v395, 920167782
  %v409 = vsel %vm401, %v392, %v408
  %v410 = vsel %vm400, %v407, %v409
  %v411 = vsel %vm399, %v389, %v392
  %v412 = vsel %vm402, %v398, 1326507024
  %v413 = vsel %vm401, %v395, %v412
  %v414 = vsel %vm400, %v411, %v413
  %v415 = vshll.u32 %v375, 8
  %v416 = vmul.u32.u64.compose %v415, %v414
  %v417 = vextract.low.u32 %v416
  %v418 = vextract.high.u32 %v416
  %v419 = vmul.u32.u64.compose %v415, %v410
  %v420 = vextract.low.u32 %v419
  %v421 = vextract.high.u32 %v419
  %v422 = vmul.u32 %v415, %v406
  %v423 = vadd.s32 %v418, %v420
  %vm424 = vc.u32 %v418, %v420
  %v425 = vadd.s32 %v421, 1
  %v426 = vsel %vm424, %v425, %v421
  %v427 = vadd.s32 %v422, %v426
  %v428 = vadd.s32 %v427, 536870912
  %v429 = vshrl.u32 %v428, 30
  %v430 = vshll.u32 %v429, 30
  %v431 = vsub.s32 %v427, %v430
  %vm432 = vcmp.lt.s32.totalorder %v431, 0
  %v433 = vsub.s32 0, %v431
  %v434 = vsel %vm432, %v433, %v431
  %v435 = vclz %v434
  %v436 = vsub.s32 %v435, 2
  %vm437 = vcmp.gt.s32.totalorder 0, %v436
  %v438 = vsel %vm437, 0, %v436
  %v439 = vsub.s32 32, %v438
  %v440 = vshll.u32 %v431, %v438
  %v441 = vshrl.u32 %v423, %v439
  %v442 = vor.u32 %v440, %v441
  %v443 = vsub.s32 4294967266, %v438
  %v444 = vadd.s32 %v443, 127
  %v445 = vshll.u32 %v444, 23
  %v446 = vor.u32 4788187, %v445
  %v447 = vand.u32 2147483647, %v446
  %v449 = vcvt.s32.f32 %v442
  %v450 = vmul.f32 %v449, %v447
  %v451 = vxor.u32 %v450, 2147483648
  %v452 = vsel %vm369, %v451, %v450
  %v453 = vsub.s32 4, %v429
  %v454 = vsel %vm369, %v453, %v429
  %v455 = vsel %vm368, %v263, %v452
  %v456 = vsel %vm368, 0, %v454
  %v457 = vcosq.f32.pop %v455
  %v458 = vsinq.f32.pop %v455
  %vm459 = vweird.f32 %v263
  %v460 = vand.u32 %v456, 3
  %vm461 = vcmp.lt.s32.totalorder %v460, 2
  %vm462 = vcmp.eq.s32.totalorder %v460, 0
  %v463 = vxor.u32 %v458, 2147483648
  %v464 = vsel %vm462, %v457, %v463
  %vm465 = vcmp.eq.s32.totalorder %v460, 2
  %v466 = vxor.u32 %v457, 2147483648
  %v467 = vsel %vm465, %v466, %v458
  %v468 = vsel %vm461, %v464, %v467
  %v469 = vsel %vm459, nan, %v468
  %v470 = vmul.f32 %v146, %v366
  %v471 = vmul.f32 %v249, %v469
  %v472 = vand.u32 2147483647, %v28
  %vm473 = vcmp.le.f32.partialorder %v472, 0.7853982
  %vm474 = vcmp.lt.s32.totalorder %v28, 0
  %v475 = vand.u32 %v28, 2139095040
  %v476 = vshrl.u32 %v475, 23
  %v477 = vsub.s32 %v476, 127
  %v478 = vand.u32 2147483647, %v28
  %v479 = vand.u32 %v478, 8388607
  %v480 = vor.u32 %v479, 8388608
  %v481 = vsub.s32 0, %v480
  %v482 = vadd.s32 %v477, 1
  %vm483 = vcmp.gt.s32.totalorder %v482, 0
  %v484 = vsel %vm483, %v482, 0
  %v485 = vshrl.u32 %v484, 5
  %v486 = vand.u32 %v484, 31
  %v487 = vsub.s32 32, %v486
  %v488 = vshrl.u32 683565275, %v487
  %v489 = vshll.u32 683565275, %v486
  %v490 = vshrl.u32 2475754826, %v487
  %v491 = vor.u32 %v489, %v490
  %v492 = vshll.u32 2475754826, %v486
  %v493 = vshrl.u32 2131351028, %v487
  %v494 = vor.u32 %v492, %v493
  %v495 = vshll.u32 2131351028, %v486
  %v496 = vshrl.u32 2102212464, %v487
  %v497 = vor.u32 %v495, %v496
  %v498 = vshll.u32 2102212464, %v486
  %v499 = vshrl.u32 920167782, %v487
  %v500 = vor.u32 %v498, %v499
  %v501 = vshll.u32 920167782, %v486
  %v502 = vshrl.u32 1326507024, %v487
  %v503 = vor.u32 %v501, %v502
  %vm504 = vcmp.lt.s32.totalorder %v485, 1
  %vm505 = vcmp.lt.s32.totalorder %v485, 2
  %vm506 = vcmp.lt.s32.totalorder %v485, 3
  %vm507 = vcmp.lt.s32.totalorder %v485, 4
  %v508 = vsel %vm504, %v488, %v491
  %v509 = vsel %vm507, %v497, 2102212464
  %v510 = vsel %vm506, %v494, %v509
  %v511 = vsel %vm505, %v508, %v510
  %v512 = vsel %vm504, %v491, %v494
  %v513 = vsel %vm507, %v500, 920167782
  %v514 = vsel %vm506, %v497, %v513
  %v515 = vsel %vm505, %v512, %v514
  %v516 = vsel %vm504, %v494, %v497
  %v517 = vsel %vm507, %v503, 1326507024
  %v518 = vsel %vm506, %v500, %v517
  %v519 = vsel %vm505, %v516, %v518
  %v520 = vshll.u32 %v480, 8
  %v521 = vmul.u32.u64.compose %v520, %v519
  %v522 = vextract.low.u32 %v521
  %v523 = vextract.high.u32 %v521
  %v524 = vmul.u32.u64.compose %v520, %v515
  %v525 = vextract.low.u32 %v524
  %v526 = vextract.high.u32 %v524
  %v527 = vmul.u32 %v520, %v511
  %v528 = vadd.s32 %v523, %v525
  %vm529 = vc.u32 %v523, %v525
  %v530 = vadd.s32 %v526, 1
  %v531 = vsel %vm529, %v530, %v526
  %v532 = vadd.s32 %v527, %v531
  %v533 = vadd.s32 %v532, 536870912
  %v534 = vshrl.u32 %v533, 30
  %v535 = vshll.u32 %v534, 30
  %v536 = vsub.s32 %v532, %v535
  %vm537 = vcmp.lt.s32.totalorder %v536, 0
  %v538 = vsub.s32 0, %v536
  %v539 = vsel %vm537, %v538, %v536
  %v540 = vclz %v539
  %v541 = vsub.s32 %v540, 2
  %vm542 = vcmp.gt.s32.totalorder 0, %v541
  %v543 = vsel %vm542, 0, %v541
  %v544 = vsub.s32 32, %v543
  %v545 = vshll.u32 %v536, %v543
  %v546 = vshrl.u32 %v528, %v544
  %v547 = vor.u32 %v545, %v546
  %v548 = vsub.s32 4294967266, %v543
  %v549 = vadd.s32 %v548, 127
  %v550 = vshll.u32 %v549, 23
  %v551 = vor.u32 4788187, %v550
  %v552 = vand.u32 2147483647, %v551
  %v554 = vcvt.s32.f32 %v547
  %v555 = vmul.f32 %v554, %v552
  %v556 = vxor.u32 %v555, 2147483648
  %v557 = vsel %vm474, %v556, %v555
  %v558 = vsub.s32 4, %v534
  %v559 = vsel %vm474, %v558, %v534
  %v560 = vsel %vm473, %v28, %v557
  %v561 = vsel %vm473, 0, %v559
  %v562 = vcosq.f32.pop %v560
  %v563 = vsinq.f32.pop %v560
  %vm564 = vweird.f32 %v28
  %v565 = vadd.s32 %v561, 3
  %v566 = vand.u32 %v565, 3
  %vm567 = vcmp.lt.s32.totalorder %v566, 2
  %vm568 = vcmp.eq.s32.totalorder %v566, 0
  %v569 = vxor.u32 %v563, 2147483648
  %v570 = vsel %vm568, %v562, %v569
  %vm571 = vcmp.eq.s32.totalorder %v566, 2
  %v572 = vxor.u32 %v562, 2147483648
  %v573 = vsel %vm571, %v572, %v563
  %v574 = vsel %vm567, %v570, %v573
  %v575 = vsel %vm564, nan, %v574
  %v576 = vand.u32 2147483647, %v29
  %vm577 = vcmp.le.f32.partialorder %v576, 0.7853982
  %vm578 = vcmp.lt.s32.totalorder %v29, 0
  %v579 = vand.u32 %v29, 2139095040
  %v580 = vshrl.u32 %v579, 23
  %v581 = vsub.s32 %v580, 127
  %v582 = vand.u32 2147483647, %v29
  %v583 = vand.u32 %v582, 8388607
  %v584 = vor.u32 %v583, 8388608
  %v585 = vsub.s32 0, %v584
  %v586 = vadd.s32 %v581, 1
  %vm587 = vcmp.gt.s32.totalorder %v586, 0
  %v588 = vsel %vm587, %v586, 0
  %v589 = vshrl.u32 %v588, 5
  %v590 = vand.u32 %v588, 31
  %v591 = vsub.s32 32, %v590
  %v592 = vshrl.u32 683565275, %v591
  %v593 = vshll.u32 683565275, %v590
  %v594 = vshrl.u32 2475754826, %v591
  %v595 = vor.u32 %v593, %v594
  %v596 = vshll.u32 2475754826, %v590
  %v597 = vshrl.u32 2131351028, %v591
  %v598 = vor.u32 %v596, %v597
  %v599 = vshll.u32 2131351028, %v590
  %v600 = vshrl.u32 2102212464, %v591
  %v601 = vor.u32 %v599, %v600
  %v602 = vshll.u32 2102212464, %v590
  %v603 = vshrl.u32 920167782, %v591
  %v604 = vor.u32 %v602, %v603
  %v605 = vshll.u32 920167782, %v590
  %v606 = vshrl.u32 1326507024, %v591
  %v607 = vor.u32 %v605, %v606
  %vm608 = vcmp.lt.s32.totalorder %v589, 1
  %vm609 = vcmp.lt.s32.totalorder %v589, 2
  %vm610 = vcmp.lt.s32.totalorder %v589, 3
  %vm611 = vcmp.lt.s32.totalorder %v589, 4
  %v612 = vsel %vm608, %v592, %v595
  %v613 = vsel %vm611, %v601, 2102212464
  %v614 = vsel %vm610, %v598, %v613
  %v615 = vsel %vm609, %v612, %v614
  %v616 = vsel %vm608, %v595, %v598
  %v617 = vsel %vm611, %v604, 920167782
  %v618 = vsel %vm610, %v601, %v617
  %v619 = vsel %vm609, %v616, %v618
  %v620 = vsel %vm608, %v598, %v601
  %v621 = vsel %vm611, %v607, 1326507024
  %v622 = vsel %vm610, %v604, %v621
  %v623 = vsel %vm609, %v620, %v622
  %v624 = vshll.u32 %v584, 8
  %v625 = vmul.u32.u64.compose %v624, %v623
  %v626 = vextract.low.u32 %v625
  %v627 = vextract.high.u32 %v625
  %v628 = vmul.u32.u64.compose %v624, %v619
  %v629 = vextract.low.u32 %v628
  %v630 = vextract.high.u32 %v628
  %v631 = vmul.u32 %v624, %v615
  %v632 = vadd.s32 %v627, %v629
  %vm633 = vc.u32 %v627, %v629
  %v634 = vadd.s32 %v630, 1
  %v635 = vsel %vm633, %v634, %v630
  %v636 = vadd.s32 %v631, %v635
  %v637 = vadd.s32 %v636, 536870912
  %v638 = vshrl.u32 %v637, 30
  %v639 = vshll.u32 %v638, 30
  %v640 = vsub.s32 %v636, %v639
  %vm641 = vcmp.lt.s32.totalorder %v640, 0
  %v642 = vsub.s32 0, %v640
  %v643 = vsel %vm641, %v642, %v640
  %v644 = vclz %v643
  %v645 = vsub.s32 %v644, 2
  %vm646 = vcmp.gt.s32.totalorder 0, %v645
  %v647 = vsel %vm646, 0, %v645
  %v648 = vsub.s32 32, %v647
  %v649 = vshll.u32 %v640, %v647
  %v650 = vshrl.u32 %v632, %v648
  %v651 = vor.u32 %v649, %v650
  %v652 = vsub.s32 4294967266, %v647
  %v653 = vadd.s32 %v652, 127
  %v654 = vshll.u32 %v653, 23
  %v655 = vor.u32 4788187, %v654
  %v656 = vand.u32 2147483647, %v655
  %v658 = vcvt.s32.f32 %v651
  %v659 = vmul.f32 %v658, %v656
  %v660 = vxor.u32 %v659, 2147483648
  %v661 = vsel %vm578, %v660, %v659
  %v662 = vsub.s32 4, %v638
  %v663 = vsel %vm578, %v662, %v638
  %v664 = vsel %vm577, %v29, %v661
  %v665 = vsel %vm577, 0, %v663
  %v666 = vcosq.f32.pop %v664
  %v667 = vsinq.f32.pop %v664
  %vm668 = vweird.f32 %v29
  %v669 = vadd.s32 %v665, 3
  %v670 = vand.u32 %v669, 3
  %vm671 = vcmp.lt.s32.totalorder %v670, 2
  %vm672 = vcmp.eq.s32.totalorder %v670, 0
  %v673 = vxor.u32 %v667, 2147483648
  %v674 = vsel %vm672, %v666, %v673
  %vm675 = vcmp.eq.s32.totalorder %v670, 2
  %v676 = vxor.u32 %v666, 2147483648
  %v677 = vsel %vm675, %v676, %v667
  %v678 = vsel %vm671, %v674, %v677
  %v679 = vsel %vm668, nan, %v678
  %v680 = vmul.f32 %v575, %v470
  %v681 = vmul.f32 %v679, %v471
  %682 = vst [vmem:[%s2] sm:$0xff] %v680
  %683 = vst [vmem:[%s2 + $0x8] sm:$0xff] %v681
  %v684 = vand.u32 2147483647, %v28
  %vm685 = vcmp.le.f32.partialorder %v684, 0.7853982
  %vm686 = vcmp.lt.s32.totalorder %v28, 0
  %v687 = vand.u32 %v28, 2139095040
  %v688 = vshrl.u32 %v687, 23
  %v689 = vsub.s32 %v688, 127
  %v690 = vand.u32 2147483647, %v28
  %v691 = vand.u32 %v690, 8388607
  %v692 = vor.u32 %v691, 8388608
  %v693 = vsub.s32 0, %v692
  %v694 = vadd.s32 %v689, 1
  %vm695 = vcmp.gt.s32.totalorder %v694, 0
  %v696 = vsel %vm695, %v694, 0
  %v697 = vshrl.u32 %v696, 5
  %v698 = vand.u32 %v696, 31
  %v699 = vsub.s32 32, %v698
  %v700 = vshrl.u32 683565275, %v699
  %v701 = vshll.u32 683565275, %v698
  %v702 = vshrl.u32 2475754826, %v699
  %v703 = vor.u32 %v701, %v702
  %v704 = vshll.u32 2475754826, %v698
  %v705 = vshrl.u32 2131351028, %v699
  %v706 = vor.u32 %v704, %v705
  %v707 = vshll.u32 2131351028, %v698
  %v708 = vshrl.u32 2102212464, %v699
  %v709 = vor.u32 %v707, %v708
  %v710 = vshll.u32 2102212464, %v698
  %v711 = vshrl.u32 920167782, %v699
  %v712 = vor.u32 %v710, %v711
  %v713 = vshll.u32 920167782, %v698
  %v714 = vshrl.u32 1326507024, %v699
  %v715 = vor.u32 %v713, %v714
  %vm716 = vcmp.lt.s32.totalorder %v697, 1
  %vm717 = vcmp.lt.s32.totalorder %v697, 2
  %vm718 = vcmp.lt.s32.totalorder %v697, 3
  %vm719 = vcmp.lt.s32.totalorder %v697, 4
  %v720 = vsel %vm716, %v700, %v703
  %v721 = vsel %vm719, %v709, 2102212464
  %v722 = vsel %vm718, %v706, %v721
  %v723 = vsel %vm717, %v720, %v722
  %v724 = vsel %vm716, %v703, %v706
  %v725 = vsel %vm719, %v712, 920167782
  %v726 = vsel %vm718, %v709, %v725
  %v727 = vsel %vm717, %v724, %v726
  %v728 = vsel %vm716, %v706, %v709
  %v729 = vsel %vm719, %v715, 1326507024
  %v730 = vsel %vm718, %v712, %v729
  %v731 = vsel %vm717, %v728, %v730
  %v732 = vshll.u32 %v692, 8
  %v733 = vmul.u32.u64.compose %v732, %v731
  %v734 = vextract.low.u32 %v733
  %v735 = vextract.high.u32 %v733
  %v736 = vmul.u32.u64.compose %v732, %v727
  %v737 = vextract.low.u32 %v736
  %v738 = vextract.high.u32 %v736
  %v739 = vmul.u32 %v732, %v723
  %v740 = vadd.s32 %v735, %v737
  %vm741 = vc.u32 %v735, %v737
  %v742 = vadd.s32 %v738, 1
  %v743 = vsel %vm741, %v742, %v738
  %v744 = vadd.s32 %v739, %v743
  %v745 = vadd.s32 %v744, 536870912
  %v746 = vshrl.u32 %v745, 30
  %v747 = vshll.u32 %v746, 30
  %v748 = vsub.s32 %v744, %v747
  %vm749 = vcmp.lt.s32.totalorder %v748, 0
  %v750 = vsub.s32 0, %v748
  %v751 = vsel %vm749, %v750, %v748
  %v752 = vclz %v751
  %v753 = vsub.s32 %v752, 2
  %vm754 = vcmp.gt.s32.totalorder 0, %v753
  %v755 = vsel %vm754, 0, %v753
  %v756 = vsub.s32 32, %v755
  %v757 = vshll.u32 %v748, %v755
  %v758 = vshrl.u32 %v740, %v756
  %v759 = vor.u32 %v757, %v758
  %v760 = vsub.s32 4294967266, %v755
  %v761 = vadd.s32 %v760, 127
  %v762 = vshll.u32 %v761, 23
  %v763 = vor.u32 4788187, %v762
  %v764 = vand.u32 2147483647, %v763
  %v766 = vcvt.s32.f32 %v759
  %v767 = vmul.f32 %v766, %v764
  %v768 = vxor.u32 %v767, 2147483648
  %v769 = vsel %vm686, %v768, %v767
  %v770 = vsub.s32 4, %v746
  %v771 = vsel %vm686, %v770, %v746
  %v772 = vsel %vm685, %v28, %v769
  %v773 = vsel %vm685, 0, %v771
  %v774 = vcosq.f32.pop %v772
  %v775 = vsinq.f32.pop %v772
  %vm776 = vweird.f32 %v28
  %v777 = vand.u32 %v773, 3
  %vm778 = vcmp.lt.s32.totalorder %v777, 2
  %vm779 = vcmp.eq.s32.totalorder %v777, 0
  %v780 = vxor.u32 %v775, 2147483648
  %v781 = vsel %vm779, %v774, %v780
  %vm782 = vcmp.eq.s32.totalorder %v777, 2
  %v783 = vxor.u32 %v774, 2147483648
  %v784 = vsel %vm782, %v783, %v775
  %v785 = vsel %vm778, %v781, %v784
  %v786 = vsel %vm776, nan, %v785
  %v787 = vand.u32 2147483647, %v29
  %vm788 = vcmp.le.f32.partialorder %v787, 0.7853982
  %vm789 = vcmp.lt.s32.totalorder %v29, 0
  %v790 = vand.u32 %v29, 2139095040
  %v791 = vshrl.u32 %v790, 23
  %v792 = vsub.s32 %v791, 127
  %v793 = vand.u32 2147483647, %v29
  %v794 = vand.u32 %v793, 8388607
  %v795 = vor.u32 %v794, 8388608
  %v796 = vsub.s32 0, %v795
  %v797 = vadd.s32 %v792, 1
  %vm798 = vcmp.gt.s32.totalorder %v797, 0
  %v799 = vsel %vm798, %v797, 0
  %v800 = vshrl.u32 %v799, 5
  %v801 = vand.u32 %v799, 31
  %v802 = vsub.s32 32, %v801
  %v803 = vshrl.u32 683565275, %v802
  %v804 = vshll.u32 683565275, %v801
  %v805 = vshrl.u32 2475754826, %v802
  %v806 = vor.u32 %v804, %v805
  %v807 = vshll.u32 2475754826, %v801
  %v808 = vshrl.u32 2131351028, %v802
  %v809 = vor.u32 %v807, %v808
  %v810 = vshll.u32 2131351028, %v801
  %v811 = vshrl.u32 2102212464, %v802
  %v812 = vor.u32 %v810, %v811
  %v813 = vshll.u32 2102212464, %v801
  %v814 = vshrl.u32 920167782, %v802
  %v815 = vor.u32 %v813, %v814
  %v816 = vshll.u32 920167782, %v801
  %v817 = vshrl.u32 1326507024, %v802
  %v818 = vor.u32 %v816, %v817
  %vm819 = vcmp.lt.s32.totalorder %v800, 1
  %vm820 = vcmp.lt.s32.totalorder %v800, 2
  %vm821 = vcmp.lt.s32.totalorder %v800, 3
  %vm822 = vcmp.lt.s32.totalorder %v800, 4
  %v823 = vsel %vm819, %v803, %v806
  %v824 = vsel %vm822, %v812, 2102212464
  %v825 = vsel %vm821, %v809, %v824
  %v826 = vsel %vm820, %v823, %v825
  %v827 = vsel %vm819, %v806, %v809
  %v828 = vsel %vm822, %v815, 920167782
  %v829 = vsel %vm821, %v812, %v828
  %v830 = vsel %vm820, %v827, %v829
  %v831 = vsel %vm819, %v809, %v812
  %v832 = vsel %vm822, %v818, 1326507024
  %v833 = vsel %vm821, %v815, %v832
  %v834 = vsel %vm820, %v831, %v833
  %v835 = vshll.u32 %v795, 8
  %v836 = vmul.u32.u64.compose %v835, %v834
  %v837 = vextract.low.u32 %v836
  %v838 = vextract.high.u32 %v836
  %v839 = vmul.u32.u64.compose %v835, %v830
  %v840 = vextract.low.u32 %v839
  %v841 = vextract.high.u32 %v839
  %v842 = vmul.u32 %v835, %v826
  %v843 = vadd.s32 %v838, %v840
  %vm844 = vc.u32 %v838, %v840
  %v845 = vadd.s32 %v841, 1
  %v846 = vsel %vm844, %v845, %v841
  %v847 = vadd.s32 %v842, %v846
  %v848 = vadd.s32 %v847, 536870912
  %v849 = vshrl.u32 %v848, 30
  %v850 = vshll.u32 %v849, 30
  %v851 = vsub.s32 %v847, %v850
  %vm852 = vcmp.lt.s32.totalorder %v851, 0
  %v853 = vsub.s32 0, %v851
  %v854 = vsel %vm852, %v853, %v851
  %v855 = vclz %v854
  %v856 = vsub.s32 %v855, 2
  %vm857 = vcmp.gt.s32.totalorder 0, %v856
  %v858 = vsel %vm857, 0, %v856
  %v859 = vsub.s32 32, %v858
  %v860 = vshll.u32 %v851, %v858
  %v861 = vshrl.u32 %v843, %v859
  %v862 = vor.u32 %v860, %v861
  %v863 = vsub.s32 4294967266, %v858
  %v864 = vadd.s32 %v863, 127
  %v865 = vshll.u32 %v864, 23
  %v866 = vor.u32 4788187, %v865
  %v867 = vand.u32 2147483647, %v866
  %v869 = vcvt.s32.f32 %v862
  %v870 = vmul.f32 %v869, %v867
  %v871 = vxor.u32 %v870, 2147483648
  %v872 = vsel %vm789, %v871, %v870
  %v873 = vsub.s32 4, %v849
  %v874 = vsel %vm789, %v873, %v849
  %v875 = vsel %vm788, %v29, %v872
  %v876 = vsel %vm788, 0, %v874
  %v877 = vcosq.f32.pop %v875
  %v878 = vsinq.f32.pop %v875
  %vm879 = vweird.f32 %v29
  %v880 = vand.u32 %v876, 3
  %vm881 = vcmp.lt.s32.totalorder %v880, 2
  %vm882 = vcmp.eq.s32.totalorder %v880, 0
  %v883 = vxor.u32 %v878, 2147483648
  %v884 = vsel %vm882, %v877, %v883
  %vm885 = vcmp.eq.s32.totalorder %v880, 2
  %v886 = vxor.u32 %v877, 2147483648
  %v887 = vsel %vm885, %v886, %v878
  %v888 = vsel %vm881, %v884, %v887
  %v889 = vsel %vm879, nan, %v888
  %v890 = vmul.f32 %v786, %v470
  %v891 = vmul.f32 %v889, %v471
  %892 = vst [vmem:[%s2 + $0x10] sm:$0xff] %v890
  %893 = vst [vmem:[%s2 + $0x18] sm:$0xff] %v891
  // Predicated region
  $region10: #{rff_r3s2_pallas.1} parent=0 // pred_check
    _
  $region11: #{rff_r3s2_pallas.1} parent=0 // pred_check_branch
    %895 = sbr.rel (0) target = $region13
  $region12: #{rff_r3s2_pallas.1} parent=0 // pred_region
    _
  $region13: #{rff_r3s2_pallas.1} parent=0 // pred_fallthru
    _
  // Predicated region
  $region14: #{rff_r3s2_pallas.1} parent=0 // pred_check
    _
  $region15: #{rff_r3s2_pallas.1} parent=0 // pred_check_branch
    %897 = sbr.rel (0) target = $region17
  $region16: #{rff_r3s2_pallas.1} parent=0 // pred_region
    _
  $region17: #{rff_r3s2_pallas.1} parent=0 // pred_fallthru
    _

</llo_original>
